<compile_context>
chip_gen: v7x
topology: tpu7x:2x2x1
jax: 0.10.0
libtpu: 0.0.40
codegen_flags: <defaults>
</compile_context>

<pallas_src>
from typing import NamedTuple

import jax
import jax.numpy as jnp
from jax.experimental import pallas as pl
from jax.experimental.pallas import tpu as pltpu

_LANE = 128
_BF16_SUBLANE = 16  # a bf16 vreg packs [16, 128]


def _round_up(x, m):
    return ((x + m - 1) // m) * m


class MLPParams(NamedTuple):
    """Padded / compute-dtype weights.  Build once with prepare_mlp_params."""
    w1: jax.Array   # (c_in, Hp)  compute dtype
    b1: jax.Array   # (1, Hp)     float32
    w2: jax.Array   # (Hp, Np)    compute dtype
    b2: jax.Array   # (1, Np)     float32
    c_in: int
    c_hidden: int
    c_out: int


def prepare_mlp_params(w1, b1, w2, b2, *, compute_dtype=jnp.bfloat16):
    """Pad output-feature dims to lane (128) multiples and cast to compute dtype.

    Call ONCE (at init / outside the jitted hot path) — this is the only pass
    over the weights outside the kernel.  Weights are (in_features,
    out_features); biases are (out_features,) or (1, out_features).
    Use compute_dtype=jnp.float32 for numerical parity with nn.Linear.
    """
    c_in, c_hidden = w1.shape
    c_hidden2, c_out = w2.shape
    assert c_hidden2 == c_hidden, (c_hidden2, c_hidden)
    hp = _round_up(c_hidden, _LANE)
    np_ = _round_up(c_out, _LANE)
    w1p = jnp.pad(w1.astype(compute_dtype), ((0, 0), (0, hp - c_hidden)))
    w2p = jnp.pad(w2.astype(compute_dtype),
                  ((0, hp - c_hidden), (0, np_ - c_out)))
    b1p = jnp.pad(jnp.reshape(b1, (1, c_hidden)).astype(jnp.float32),
                  ((0, 0), (0, hp - c_hidden)))
    b2p = jnp.pad(jnp.reshape(b2, (1, c_out)).astype(jnp.float32),
                  ((0, 0), (0, np_ - c_out)))
    return MLPParams(w1p, b1p, w2p, b2p, c_in, c_hidden, c_out)


def mlp_kernel(x_ref, w1_ref, b1_ref, w2_ref, b2_ref, o_ref):
    """relu(x @ W1 + b1) @ W2 + b2 on one (tile_b, :) batch tile.

    W1/W2/b1/b2 feature dims were padded to 128 multiples once in
    prepare_mlp_params, so the hidden intermediate and the output store are
    lane-dense.  Matmuls accumulate in f32; bias-add / ReLU stay f32.
    """
    # TODO(synk): for very large hidden dims, chunk Hp inside the kernel
    #             (slab matmul1 -> bias+ReLU -> matmul2 partial accumulate)
    #             and/or add an Hp-reduction grid axis (pl.when-initialized
    #             accumulator, 256-wide N tiles) to bound VMEM on v7x.
    x = x_ref[...].astype(w1_ref.dtype)          # per-tile cast on the VPU
    h = jnp.dot(x, w1_ref[...], preferred_element_type=jnp.float32)
    h = jnp.maximum(h + b1_ref[...], 0.0)
    out = jnp.dot(h.astype(w2_ref.dtype), w2_ref[...],
                  preferred_element_type=jnp.float32)
    o_ref[...] = (out + b2_ref[...]).astype(o_ref.dtype)


def _vmem_budget_bytes():
    """~80% of this generation's VMEM (64 MiB fallback => safe on v7x too)."""
    cap = 64 * 1024 * 1024
    try:
        cap = int(getattr(pltpu.get_tpu_info(), "vmem_capacity_bytes", cap))
    except Exception:
        pass
    return int(cap * 0.8)


def _vmem_estimate(tile_b, c_in, hp, np_, x_b, w_b, o_b):
    return (2 * tile_b * c_in * x_b          # x tile (double buffered)
            + 2 * tile_b * np_ * o_b         # out tile (double buffered)
            + 2 * (c_in * hp + hp * np_) * w_b   # weights (worst case 2 copies)
            + 2 * (hp + np_) * 4             # biases
            + tile_b * hp * 4                # f32 hidden intermediate
            + tile_b * np_ * 4)              # f32 pre-store intermediate


def _pick_tile_b(B, c_in, hp, np_, x_b, w_b, o_b, budget):
    if B <= _BF16_SUBLANE:
        return _BF16_SUBLANE
    # Big tiles amortize the ~0.35us per-grid-step overhead (v5e/v6e), but keep
    # >= 2 grid steps so ("parallel",) can shard batch across v7x's 2 TCs.
    tile_b = min(512, _round_up(B, _BF16_SUBLANE))
    tile_b = min(tile_b, _round_up(pl.cdiv(B, 2), _BF16_SUBLANE))
    tile_b = max(_BF16_SUBLANE, tile_b)
    # Clamp against the VMEM budget (weights are resident in VMEM).
    while (tile_b > _BF16_SUBLANE and
           _vmem_estimate(tile_b, c_in, hp, np_, x_b, w_b, o_b) > budget):
        tile_b = max(_BF16_SUBLANE, _round_up(tile_b // 2, _BF16_SUBLANE))
    return tile_b


# Cache: does this JAX/Mosaic build accept pipeline_mode=pl.Buffered(1)?
_SINGLE_BUFFER_OK = [True]


def mlp_forward(x, params, *, tile_b=None, out_dtype=None):
    """Fused relu(x @ W1 + b1) @ W2 + b2 (PyTorch MLP with num_layers=2).

    `params` must come from prepare_mlp_params (weights padded/cast once).
    Default out_dtype is x.dtype; pass jnp.bfloat16 if the consumer takes
    bf16 (halves output HBM writeback bytes).
    """
    # TODO(synk): num_layers > 2 (extra Linear+ReLU blocks) not fused here;
    #             only the default 2-layer MLP is implemented.
    B, c_in = x.shape
    assert c_in == params.c_in, (c_in, params.c_in)
    hp = params.w1.shape[1]
    np_ = params.w2.shape[1]
    if out_dtype is None:
        out_dtype = x.dtype
    x_b = jnp.dtype(x.dtype).itemsize
    w_b = jnp.dtype(params.w1.dtype).itemsize
    o_b = jnp.dtype(out_dtype).itemsize

    budget = _vmem_budget_bytes()
    if tile_b is None:
        tile_b = _pick_tile_b(B, c_in, hp, np_, x_b, w_b, o_b, budget)
    else:
        tile_b = max(_BF16_SUBLANE,
                     _round_up(min(tile_b, _round_up(B, _BF16_SUBLANE)),
                               _BF16_SUBLANE))
    grid = (pl.cdiv(B, tile_b),)

    est = _vmem_estimate(tile_b, c_in, hp, np_, x_b, w_b, o_b)
    vmem_limit = int(min(max(int(est * 1.5), 32 * 1024 * 1024), budget))

    # Advisory cost estimate using the actually-DMA'd (padded) byte counts.
    flops = 2 * B * (c_in * hp + hp * np_)
    bytes_accessed = int(x.size * x_b
                         + params.w1.size * w_b + params.w2.size * w_b
                         + params.b1.size * 4 + params.b2.size * 4
                         + B * np_ * o_b)
    cost = pl.CostEstimate(flops=flops, transcendentals=0,
                           bytes_accessed=bytes_accessed)

    def call(single_buffer_weights):
        def wspec(shape):
            # Constant index_map -> same block every grid step; a single
            # buffer avoids holding the weights twice in VMEM.
            if single_buffer_weights:
                return pl.BlockSpec(shape, lambda i: (0, 0),
                                    pipeline_mode=pl.Buffered(1))
            return pl.BlockSpec(shape, lambda i: (0, 0))

        return pl.pallas_call(
            mlp_kernel,
            out_shape=jax.ShapeDtypeStruct((B, np_), out_dtype),
            grid_spec=pltpu.PrefetchScalarGridSpec(
                num_scalar_prefetch=0,
                grid=grid,
                in_specs=[
                    pl.BlockSpec((tile_b, c_in), lambda i: (i, 0)),  # x tile
                    wspec((c_in, hp)),                               # W1
                    wspec((1, hp)),                                  # b1
                    wspec((hp, np_)),                                # W2
                    wspec((1, np_)),                                 # b2
                ],
                out_specs=pl.BlockSpec((tile_b, np_), lambda i: (i, 0)),
            ),
            compiler_params=pltpu.CompilerParams(
                # Independent batch tiles -> shard across v7x's 2 TensorCores.
                dimension_semantics=("parallel",),
                vmem_limit_bytes=vmem_limit),
            cost_estimate=cost,
        )(x, params.w1, params.b1, params.w2, params.b2)

    # NOTE: the fallback is resolved eagerly (this wrapper is not meant to be
    # jitted as-is); once resolved, the choice is cached for later calls.
    if _SINGLE_BUFFER_OK[0]:
        try:
            out_padded = call(True)
        except Exception:
            _SINGLE_BUFFER_OK[0] = False
            out_padded = call(False)
    else:
        out_padded = call(False)

    if np_ == params.c_out:
        return out_padded
    return out_padded[:, :params.c_out]


def init_mlp_params(key, c_in, c_hidden, c_out, dtype=jnp.float32):
    """Deterministic init mimicking PyTorch nn.Linear (uniform +-1/sqrt(fan_in))."""
    k1, k2, k3, k4 = jax.random.split(key, 4)
    bound1 = 1.0 / jnp.sqrt(jnp.float32(c_in))
    bound2 = 1.0 / jnp.sqrt(jnp.float32(c_hidden))
    w1 = jax.random.uniform(k1, (c_in, c_hidden), dtype, -bound1, bound1)
    b1 = jax.random.uniform(k2, (1, c_hidden), dtype, -bound1, bound1)
    w2 = jax.random.uniform(k3, (c_hidden, c_out), dtype, -bound2, bound2)
    b2 = jax.random.uniform(k4, (1, c_out), dtype, -bound2, bound2)
    return w1, b1, w2, b2


if __name__ == "__main__":
    # MLP(c_in=32, c_hidden=64, c_out=16), num_layers=2.  Batch of 256 so the
    # batch-tiled grid has 2 steps (one per v7x TensorCore; cheap on v5e/v6e).
    B, c_in, c_hidden, c_out = 256, 32, 64, 16

    key = jax.random.PRNGKey(0)
    kx, kp = jax.random.split(key)
    x = jax.random.normal(kx, (B, c_in), jnp.float32)
    w1, b1, w2, b2 = init_mlp_params(kp, c_in, c_hidden, c_out)

    # Pad/cast the weights ONCE, outside the per-call hot path.
    params = prepare_mlp_params(w1, b1, w2, b2)

    out = mlp_forward(x, params)
    out = jax.block_until_ready(out)

    # Pure-JAX f32 reference of the same forward pass.  Kernel matmuls run in
    # bf16 with f32 accumulation, hence the relaxed tolerance; use
    # prepare_mlp_params(..., compute_dtype=jnp.float32) for f32 parity.
    ref = jnp.maximum(x @ w1 + b1, 0.0) @ w2 + b2
    assert out.shape == (B, c_out)
    err = float(jnp.max(jnp.abs(out - ref)))
    assert jnp.allclose(out, ref, atol=2e-2, rtol=2e-2), f"max abs err {err}"

    print("KERNEL_OK")
</pallas_src>

<mosaic_0001>
module attributes {stable_mosaic.version = 11 : i64} {
  func.func @mlp_kernel(%arg0: i32, %arg1: memref<128x32xf32, #tpu.memory_space<vmem>>, %arg2: memref<32x128xbf16, #tpu.memory_space<vmem>>, %arg3: memref<1x128xf32, #tpu.memory_space<vmem>>, %arg4: memref<128x128xbf16, #tpu.memory_space<vmem>>, %arg5: memref<1x128xf32, #tpu.memory_space<vmem>>, %arg6: memref<128x128xf32, #tpu.memory_space<vmem>>) attributes {dimension_semantics = [#tpu.dimension_semantics<parallel>], iteration_bounds = array<i64: 2>, scalar_prefetch = 0 : i64, scratch_operands = 0 : i64, tpu.core_type = #tpu.core_type<tc>, window_params = [{transform_indices = @transform_0, window_bounds = array<i64: 128, 32>}, {pipeline_mode = #tpu.pipeline_mode<synchronous>, transform_indices = @transform_1, window_bounds = array<i64: 32, 128>}, {pipeline_mode = #tpu.pipeline_mode<synchronous>, transform_indices = @transform_2, window_bounds = array<i64: 1, 128>}, {pipeline_mode = #tpu.pipeline_mode<synchronous>, transform_indices = @transform_3, window_bounds = array<i64: 128, 128>}, {pipeline_mode = #tpu.pipeline_mode<synchronous>, transform_indices = @transform_4, window_bounds = array<i64: 1, 128>}, {transform_indices = @transform_5, window_bounds = array<i64: 128, 128>}]} {
    %c0 = arith.constant 0 : index
    %c0_0 = arith.constant 0 : index
    %0 = vector.load %arg1[%c0, %c0_0] : memref<128x32xf32, #tpu.memory_space<vmem>>, vector<128x32xf32>
    %1 = arith.truncf %0 : vector<128x32xf32> to vector<128x32xbf16>
    %c0_1 = arith.constant 0 : index
    %c0_2 = arith.constant 0 : index
    %2 = vector.load %arg2[%c0_1, %c0_2] : memref<32x128xbf16, #tpu.memory_space<vmem>>, vector<32x128xbf16>
    %cst = arith.constant dense<0.000000e+00> : vector<128x128xf32>
    %3 = tpu.matmul %1, %2, %cst {dimension_numbers = #tpu.dot_dimension_numbers<[1], [0], [0], [1], [0, 0, 1, 1], [], []>} : vector<128x32xbf16>, vector<32x128xbf16>, vector<128x128xf32> -> vector<128x128xf32>
    %c0_3 = arith.constant 0 : index
    %c0_4 = arith.constant 0 : index
    %4 = vector.load %arg3[%c0_3, %c0_4] : memref<1x128xf32, #tpu.memory_space<vmem>>, vector<1x128xf32>
    %5 = vector.broadcast %4 : vector<1x128xf32> to vector<128x128xf32>
    %6 = arith.addf %3, %5 : vector<128x128xf32>
    %cst_5 = arith.constant 0.000000e+00 : f32
    %7 = vector.broadcast %cst_5 : f32 to vector<128x128xf32>
    %8 = arith.maximumf %6, %7 : vector<128x128xf32>
    %9 = arith.truncf %8 : vector<128x128xf32> to vector<128x128xbf16>
    %c0_6 = arith.constant 0 : index
    %c0_7 = arith.constant 0 : index
    %10 = vector.load %arg4[%c0_6, %c0_7] : memref<128x128xbf16, #tpu.memory_space<vmem>>, vector<128x128xbf16>
    %cst_8 = arith.constant dense<0.000000e+00> : vector<128x128xf32>
    %11 = tpu.matmul %9, %10, %cst_8 {dimension_numbers = #tpu.dot_dimension_numbers<[1], [0], [0], [1], [0, 0, 1, 1], [], []>} : vector<128x128xbf16>, vector<128x128xbf16>, vector<128x128xf32> -> vector<128x128xf32>
    %c0_9 = arith.constant 0 : index
    %c0_10 = arith.constant 0 : index
    %12 = vector.load %arg5[%c0_9, %c0_10] : memref<1x128xf32, #tpu.memory_space<vmem>>, vector<1x128xf32>
    %13 = vector.broadcast %12 : vector<1x128xf32> to vector<128x128xf32>
    %14 = arith.addf %11, %13 : vector<128x128xf32>
    %c0_11 = arith.constant 0 : index
    %c0_12 = arith.constant 0 : index
    %15 = vector.load %arg6[%c0_11, %c0_12] : memref<128x128xf32, #tpu.memory_space<vmem>>, vector<128x128xf32>
    tpu.vector_store %arg6[%c0_11, %c0_12], %14 {strides = array<i32>} : memref<128x128xf32, #tpu.memory_space<vmem>>, vector<128x128xf32>,
    return
  }
  func.func @transform_0(%arg0: i32) -> (i32, i32) {
    %c0_i32 = arith.constant 0 : i32
    %c0_i32_0 = arith.constant 0 : i32
    return %arg0, %c0_i32 : i32, i32
  }
  func.func @transform_1(%arg0: i32) -> (i32, i32) {
    %c0_i32 = arith.constant 0 : i32
    %c0_i32_0 = arith.constant 0 : i32
    %c0_i32_1 = arith.constant 0 : i32
    return %c0_i32, %c0_i32_0 : i32, i32
  }
  func.func @transform_2(%arg0: i32) -> (i32, i32) {
    %c0_i32 = arith.constant 0 : i32
    %c0_i32_0 = arith.constant 0 : i32
    %c0_i32_1 = arith.constant 0 : i32
    return %c0_i32, %c0_i32_0 : i32, i32
  }
  func.func @transform_3(%arg0: i32) -> (i32, i32) {
    %c0_i32 = arith.constant 0 : i32
    %c0_i32_0 = arith.constant 0 : i32
    %c0_i32_1 = arith.constant 0 : i32
    return %c0_i32, %c0_i32_0 : i32, i32
  }
  func.func @transform_4(%arg0: i32) -> (i32, i32) {
    %c0_i32 = arith.constant 0 : i32
    %c0_i32_0 = arith.constant 0 : i32
    %c0_i32_1 = arith.constant 0 : i32
    return %c0_i32, %c0_i32_0 : i32, i32
  }
  func.func @transform_5(%arg0: i32) -> (i32, i32) {
    %c0_i32 = arith.constant 0 : i32
    %c0_i32_0 = arith.constant 0 : i32
    return %arg0, %c0_i32 : i32, i32
  }
}

module attributes {stable_mosaic.version = 11 : i64} {
  func.func @mlp_kernel(%arg0: i32, %arg1: memref<128x32xf32, #tpu.memory_space<vmem>>, %arg2: memref<32x128xbf16, #tpu.memory_space<vmem>>, %arg3: memref<1x128xf32, #tpu.memory_space<vmem>>, %arg4: memref<128x128xbf16, #tpu.memory_space<vmem>>, %arg5: memref<1x128xf32, #tpu.memory_space<vmem>>, %arg6: memref<128x128xf32, #tpu.memory_space<vmem>>) attributes {dimension_semantics = [#tpu.dimension_semantics<parallel>], iteration_bounds = array<i64: 2>, scalar_prefetch = 0 : i64, scratch_operands = 0 : i64, tpu.core_type = #tpu.core_type<tc>, window_params = [{transform_indices = @transform_0, window_bounds = array<i64: 128, 32>}, {pipeline_mode = #tpu.pipeline_mode<synchronous>, transform_indices = @transform_1, window_bounds = array<i64: 32, 128>}, {pipeline_mode = #tpu.pipeline_mode<synchronous>, transform_indices = @transform_2, window_bounds = array<i64: 1, 128>}, {pipeline_mode = #tpu.pipeline_mode<synchronous>, transform_indices = @transform_3, window_bounds = array<i64: 128, 128>}, {pipeline_mode = #tpu.pipeline_mode<synchronous>, transform_indices = @transform_4, window_bounds = array<i64: 1, 128>}, {transform_indices = @transform_5, window_bounds = array<i64: 128, 128>}]} {
    %c0 = arith.constant 0 : index
    %c0_0 = arith.constant 0 : index
    %0 = vector.load %arg1[%c0, %c0_0] : memref<128x32xf32, #tpu.memory_space<vmem>>, vector<128x32xf32>
    %1 = arith.truncf %0 : vector<128x32xf32> to vector<128x32xbf16>
    %c0_1 = arith.constant 0 : index
    %c0_2 = arith.constant 0 : index
    %2 = vector.load %arg2[%c0_1, %c0_2] : memref<32x128xbf16, #tpu.memory_space<vmem>>, vector<32x128xbf16>
    %cst = arith.constant dense<0.000000e+00> : vector<128x128xf32>
    %3 = tpu.matmul %1, %2, %cst {dimension_numbers = #tpu.dot_dimension_numbers<[1], [0], [0], [1], [0, 0, 1, 1], [], []>} : vector<128x32xbf16>, vector<32x128xbf16>, vector<128x128xf32> -> vector<128x128xf32>
    %c0_3 = arith.constant 0 : index
    %c0_4 = arith.constant 0 : index
    %4 = vector.load %arg3[%c0_3, %c0_4] : memref<1x128xf32, #tpu.memory_space<vmem>>, vector<1x128xf32>
    %5 = vector.broadcast %4 : vector<1x128xf32> to vector<128x128xf32>
    %6 = arith.addf %3, %5 : vector<128x128xf32>
    %cst_5 = arith.constant 0.000000e+00 : f32
    %7 = vector.broadcast %cst_5 : f32 to vector<128x128xf32>
    %8 = arith.maximumf %6, %7 : vector<128x128xf32>
    %9 = arith.truncf %8 : vector<128x128xf32> to vector<128x128xbf16>
    %c0_6 = arith.constant 0 : index
    %c0_7 = arith.constant 0 : index
    %10 = vector.load %arg4[%c0_6, %c0_7] : memref<128x128xbf16, #tpu.memory_space<vmem>>, vector<128x128xbf16>
    %cst_8 = arith.constant dense<0.000000e+00> : vector<128x128xf32>
    %11 = tpu.matmul %9, %10, %cst_8 {dimension_numbers = #tpu.dot_dimension_numbers<[1], [0], [0], [1], [0, 0, 1, 1], [], []>} : vector<128x128xbf16>, vector<128x128xbf16>, vector<128x128xf32> -> vector<128x128xf32>
    %c0_9 = arith.constant 0 : index
    %c0_10 = arith.constant 0 : index
    %12 = vector.load %arg5[%c0_9, %c0_10] : memref<1x128xf32, #tpu.memory_space<vmem>>, vector<1x128xf32>
    %13 = vector.broadcast %12 : vector<1x128xf32> to vector<128x128xf32>
    %14 = arith.addf %11, %13 : vector<128x128xf32>
    %c0_11 = arith.constant 0 : index
    %c0_12 = arith.constant 0 : index
    %15 = vector.load %arg6[%c0_11, %c0_12] : memref<128x128xf32, #tpu.memory_space<vmem>>, vector<128x128xf32>
    tpu.vector_store %arg6[%c0_11, %c0_12], %14 {strides = array<i32>} : memref<128x128xf32, #tpu.memory_space<vmem>>, vector<128x128xf32>,
    return
  }
  func.func @transform_0(%arg0: i32) -> (i32, i32) {
    %c0_i32 = arith.constant 0 : i32
    %c0_i32_0 = arith.constant 0 : i32
    return %arg0, %c0_i32 : i32, i32
  }
  func.func @transform_1(%arg0: i32) -> (i32, i32) {
    %c0_i32 = arith.constant 0 : i32
    %c0_i32_0 = arith.constant 0 : i32
    %c0_i32_1 = arith.constant 0 : i32
    return %c0_i32, %c0_i32_0 : i32, i32
  }
  func.func @transform_2(%arg0: i32) -> (i32, i32) {
    %c0_i32 = arith.constant 0 : i32
    %c0_i32_0 = arith.constant 0 : i32
    %c0_i32_1 = arith.constant 0 : i32
    return %c0_i32, %c0_i32_0 : i32, i32
  }
  func.func @transform_3(%arg0: i32) -> (i32, i32) {
    %c0_i32 = arith.constant 0 : i32
    %c0_i32_0 = arith.constant 0 : i32
    %c0_i32_1 = arith.constant 0 : i32
    return %c0_i32, %c0_i32_0 : i32, i32
  }
  func.func @transform_4(%arg0: i32) -> (i32, i32) {
    %c0_i32 = arith.constant 0 : i32
    %c0_i32_0 = arith.constant 0 : i32
    %c0_i32_1 = arith.constant 0 : i32
    return %c0_i32, %c0_i32_0 : i32, i32
  }
  func.func @transform_5(%arg0: i32) -> (i32, i32) {
    %c0_i32 = arith.constant 0 : i32
    %c0_i32_0 = arith.constant 0 : i32
    return %arg0, %c0_i32 : i32, i32
  }
}

</mosaic_0001>

<llo_original>
// kernel: tpu_custom_call.1
$region0: #{tpu_custom_call.1}
  #allocation0 [shape = 'u32[]', space=smem, size = 0x4, offset = 0x4, fixed_abs, tag = 'smem constant byte address 0x4 - core index']
  #allocation1 [shape = 'u32[144,128]{1,0:T(1,128)}', space=vmem, size = 0x12000, scoped, tag = 'internal scratch']
  %s0 = inlined_call_operand.vmem [shape: f32[256,32], index: 0, kind: input, shape index: {}]
  %s1 = inlined_call_operand.vmem [shape: bf16[32,128], index: 1, kind: input, shape index: {}]
  %s2 = inlined_call_operand.vmem [shape: f32[1,128], index: 2, kind: input, shape index: {}]
  %s3 = inlined_call_operand.vmem [shape: bf16[128,128], index: 3, kind: input, shape index: {}]
  %s4 = inlined_call_operand.vmem [shape: f32[1,128], index: 4, kind: input, shape index: {}]
  %s5 = inlined_call_operand.hbm [shape: f32[256,128], index: 5, kind: output, shape index: {}]
  %s6 = sld [smem:[#allocation0]]
  $region53: #{tpu_custom_call.1} parent=0
    _
  %s8 = ssub.s32 1, %s6
  %s9 = scalar_select 0, %s8, %s6
  $region1: #{tpu_custom_call.1} parent=0
    #allocation2 [shape = 'u8[131072]{0}', space=vmem, size = 0x20000, scoped, tag = 'output window, operand 0']
    #allocation3 [shape = 's32[2]{0}', space=sflag, size = 0x8, scoped, tag = 'scoped memory for tpu_custom_call.1']
    %10 = vsyncpa [#allocation3], 0
    %s11 = scalar_lea.sflag [#allocation3], 1
    %12 = vsyncpa %s11, 0
    loop: start=0, step=1, limit=4
    $region2: #{tpu_custom_call.1} parent=1 // loop_pre_header
      _
    $region3: #{tpu_custom_call.1} parent=1 // loop_header
      %s14 = sphi 0, %s18
      %p15 = scmp.ge.s32.totalorder %s14, 4
      %s24 = sphi 0, %s26
      %s27 = sphi 0, %s24
      %s28 = sphi 0, %s27
      %s44 = sphi 0, %s28
      %s48 = sphi 0, %s48
      %s50 = sphi 0, %s48
      %s51 = sphi 0, %s50
      %s65 = sphi 0, %s51
      %s69 = sphi 0, %s69
      %s71 = sphi 0, %s69
      %s72 = sphi 0, %s71
      %s86 = sphi 0, %s72
      %s90 = sphi 0, %s90
      %s92 = sphi 0, %s90
      %s93 = sphi 0, %s92
      %s107 = sphi 0, %s93
      %s111 = sphi 0, %s111
      %s113 = sphi 0, %s111
      %s114 = sphi 0, %s113
      %s128 = sphi 0, %s114
      %s134 = sphi 0, %s136
      %s137 = sphi 0, %s134
      %s138 = sphi 0, %s137
      %s154 = sphi 0, %s138
    $region4: #{tpu_custom_call.1} parent=1 // loop_header_branch
      %17 = sbr.rel (%p15) target = $region8
    $region5: #{tpu_custom_call.1} parent=1 // loop_body
      %s19 = ssub.s32 %s14, 1
      %s20 = ssub.s32 %s14, 2
      %s21 = sadd.s32 %s14, 1
      %s22 = ssub.s32 %s14, %s21
      %p23 = scmp.eq.s32.totalorder %s22, 0
      %s25 = sadd.s32 %s24, 1
      %s26 = scalar_select %p23, %s24, %s25
      %p29 = pneg %p23
      %p30 = scmp.eq.s32.totalorder %s14, 1
      %p31 = por %p29, %p30
      %p32 = scmp.ne.s32.totalorder %s24, %s27
      %p33 = scmp.eq.s32.totalorder %s14, 0
      %p34 = por %p32, %p33
      %p35 = scmp.ne.s32.totalorder %s24, %s27
      %p36 = scmp.eq.s32.totalorder %s19, 1
      %p37 = por %p35, %p36
      %p38 = scmp.ne.s32.totalorder %s27, %s28
      %p39 = scmp.eq.s32.totalorder %s19, 0
      %p40 = por %p38, %p39
      %p41 = scmp.ne.s32.totalorder %s27, %s28
      %p42 = scmp.eq.s32.totalorder %s20, 1
      %p43 = por %p41, %p42
      %p45 = scmp.ne.s32.totalorder %s28, %s44
      %p46 = scmp.eq.s32.totalorder %s20, 0
      %p47 = por %p45, %p46
      %s49 = sadd.s32 %s48, 1
      %p52 = scmp.eq.s32.totalorder %s14, 1
      %p53 = scmp.ne.s32.totalorder %s48, %s50
      %p54 = scmp.eq.s32.totalorder %s14, 0
      %p55 = por %p53, %p54
      %p56 = scmp.ne.s32.totalorder %s48, %s50
      %p57 = scmp.eq.s32.totalorder %s19, 1
      %p58 = por %p56, %p57
      %p59 = scmp.ne.s32.totalorder %s50, %s51
      %p60 = scmp.eq.s32.totalorder %s19, 0
      %p61 = por %p59, %p60
      %p62 = scmp.ne.s32.totalorder %s50, %s51
      %p63 = scmp.eq.s32.totalorder %s20, 1
      %p64 = por %p62, %p63
      %p66 = scmp.ne.s32.totalorder %s51, %s65
      %p67 = scmp.eq.s32.totalorder %s20, 0
      %p68 = por %p66, %p67
      %s70 = sadd.s32 %s69, 1
      %p73 = scmp.eq.s32.totalorder %s14, 1
      %p74 = scmp.ne.s32.totalorder %s69, %s71
      %p75 = scmp.eq.s32.totalorder %s14, 0
      %p76 = por %p74, %p75
      %p77 = scmp.ne.s32.totalorder %s69, %s71
      %p78 = scmp.eq.s32.totalorder %s19, 1
      %p79 = por %p77, %p78
      %p80 = scmp.ne.s32.totalorder %s71, %s72
      %p81 = scmp.eq.s32.totalorder %s19, 0
      %p82 = por %p80, %p81
      %p83 = scmp.ne.s32.totalorder %s71, %s72
      %p84 = scmp.eq.s32.totalorder %s20, 1
      %p85 = por %p83, %p84
      %p87 = scmp.ne.s32.totalorder %s72, %s86
      %p88 = scmp.eq.s32.totalorder %s20, 0
      %p89 = por %p87, %p88
      %s91 = sadd.s32 %s90, 1
      %p94 = scmp.eq.s32.totalorder %s14, 1
      %p95 = scmp.ne.s32.totalorder %s90, %s92
      %p96 = scmp.eq.s32.totalorder %s14, 0
      %p97 = por %p95, %p96
      %p98 = scmp.ne.s32.totalorder %s90, %s92
      %p99 = scmp.eq.s32.totalorder %s19, 1
      %p100 = por %p98, %p99
      %p101 = scmp.ne.s32.totalorder %s92, %s93
      %p102 = scmp.eq.s32.totalorder %s19, 0
      %p103 = por %p101, %p102
      %p104 = scmp.ne.s32.totalorder %s92, %s93
      %p105 = scmp.eq.s32.totalorder %s20, 1
      %p106 = por %p104, %p105
      %p108 = scmp.ne.s32.totalorder %s93, %s107
      %p109 = scmp.eq.s32.totalorder %s20, 0
      %p110 = por %p108, %p109
      %s112 = sadd.s32 %s111, 1
      %p115 = scmp.eq.s32.totalorder %s14, 1
      %p116 = scmp.ne.s32.totalorder %s111, %s113
      %p117 = scmp.eq.s32.totalorder %s14, 0
      %p118 = por %p116, %p117
      %p119 = scmp.ne.s32.totalorder %s111, %s113
      %p120 = scmp.eq.s32.totalorder %s19, 1
      %p121 = por %p119, %p120
      %p122 = scmp.ne.s32.totalorder %s113, %s114
      %p123 = scmp.eq.s32.totalorder %s19, 0
      %p124 = por %p122, %p123
      %p125 = scmp.ne.s32.totalorder %s113, %s114
      %p126 = scmp.eq.s32.totalorder %s20, 1
      %p127 = por %p125, %p126
      %p129 = scmp.ne.s32.totalorder %s114, %s128
      %p130 = scmp.eq.s32.totalorder %s20, 0
      %p131 = por %p129, %p130
      %s132 = ssub.s32 %s14, %s21
      %p133 = scmp.eq.s32.totalorder %s132, 0
      %s135 = sadd.s32 %s134, 1
      %s136 = scalar_select %p133, %s134, %s135
      %p139 = pneg %p133
      %p140 = scmp.eq.s32.totalorder %s14, 1
      %p141 = por %p139, %p140
      %p142 = scmp.ne.s32.totalorder %s134, %s137
      %p143 = scmp.eq.s32.totalorder %s14, 0
      %p144 = por %p142, %p143
      %p145 = scmp.ne.s32.totalorder %s134, %s137
      %p146 = scmp.eq.s32.totalorder %s19, 1
      %p147 = por %p145, %p146
      %p148 = scmp.ne.s32.totalorder %s137, %s138
      %p149 = scmp.eq.s32.totalorder %s19, 0
      %p150 = por %p148, %p149
      %p151 = scmp.ne.s32.totalorder %s137, %s138
      %p152 = scmp.eq.s32.totalorder %s20, 1
      %p153 = por %p151, %p152
      %p155 = scmp.ne.s32.totalorder %s138, %s154
      %p156 = scmp.eq.s32.totalorder %s20, 0
      %p157 = por %p155, %p156
      %p158 = scmp.le.s32.totalorder 1, %s14
      %p159 = scmp.lt.s32.totalorder %s14, 3
      %p160 = pnand %p158, %p159
      %p161 = pneg %p160
      // Predicated region
      $region9: #{tpu_custom_call.1} parent=5 // pred_check
        _
      $region10: #{tpu_custom_call.1} parent=5 // pred_check_branch
        %163 = sbr.rel (%p160) target = $region12
      $region11: #{tpu_custom_call.1} parent=5 // pred_region
        %s164 = ssub.s32 %s14, 1
        // Predicated region
        $region13: #{tpu_custom_call.1} parent=11 // pred_check
          %p165 = pneg %p61
        $region14: #{tpu_custom_call.1} parent=11 // pred_check_branch
          %167 = sbr.rel (%p165) target = $region16
        $region15: #{tpu_custom_call.1} parent=11 // pred_region
          _
        $region16: #{tpu_custom_call.1} parent=11 // pred_fallthru
          _
        // Predicated region
        $region17: #{tpu_custom_call.1} parent=11 // pred_check
          %p168 = pneg %p82
        $region18: #{tpu_custom_call.1} parent=11 // pred_check_branch
          %170 = sbr.rel (%p168) target = $region20
        $region19: #{tpu_custom_call.1} parent=11 // pred_region
          _
        $region20: #{tpu_custom_call.1} parent=11 // pred_fallthru
          _
        // Predicated region
        $region21: #{tpu_custom_call.1} parent=11 // pred_check
          %p171 = pneg %p103
        $region22: #{tpu_custom_call.1} parent=11 // pred_check_branch
          %173 = sbr.rel (%p171) target = $region24
        $region23: #{tpu_custom_call.1} parent=11 // pred_region
          _
        $region24: #{tpu_custom_call.1} parent=11 // pred_fallthru
          _
        // Predicated region
        $region25: #{tpu_custom_call.1} parent=11 // pred_check
          %p174 = pneg %p124
        $region26: #{tpu_custom_call.1} parent=11 // pred_check_branch
          %176 = sbr.rel (%p174) target = $region28
        $region27: #{tpu_custom_call.1} parent=11 // pred_region
          _
        $region28: #{tpu_custom_call.1} parent=11 // pred_fallthru
          _
      $region12: #{tpu_custom_call.1} parent=5 // pred_fallthru
        _
      %p177 = scmp.lt.s32.totalorder %s14, 2
      // Predicated region
      $region29: #{tpu_custom_call.1} parent=5 // pred_check
        %p178 = pneg %p177
      $region30: #{tpu_custom_call.1} parent=5 // pred_check_branch
        %180 = sbr.rel (%p178) target = $region32
      $region31: #{tpu_custom_call.1} parent=5 // pred_region
        // Predicated region
        $region33: #{tpu_custom_call.1} parent=31 // pred_check
          %p181 = pneg %p34
        $region34: #{tpu_custom_call.1} parent=31 // pred_check_branch
          %183 = sbr.rel (%p181) target = $region36
        $region35: #{tpu_custom_call.1} parent=31 // pred_region
          %s184 = smul.u32 16, %s14
          %p185 = scmp.lt.s32.totalorder %s184, 31
          %s186 = scalar_select %p185, %s184, 31
          %s187 = smul.addr %s186, 8
          %s188 = scalar_lea.vmem %s0, %s187
          %s189 = smul.u32 16, %s14
        $region36: #{tpu_custom_call.1} parent=31 // pred_fallthru
          _
      $region32: #{tpu_custom_call.1} parent=5 // pred_fallthru
        _
      %p190 = scmp.le.s32.totalorder 1, %s14
      %p191 = scmp.lt.s32.totalorder %s14, 3
      %p192 = pnand %p190, %p191
      %p193 = pneg %p192
      // Predicated region
      $region37: #{tpu_custom_call.1} parent=5 // pred_check
        _
      $region38: #{tpu_custom_call.1} parent=5 // pred_check_branch
        %195 = sbr.rel (%p192) target = $region40
      $region39: #{tpu_custom_call.1} parent=5 // pred_region
        %s196 = ssub.s32 %s14, 1
        %s197 = smul.u32 16, %s19
        %p198 = scmp.lt.s32.totalorder %s197, 31
        %s199 = scalar_select %p198, %s197, 31
        %s200 = smul.addr %s199, 8
        %s201 = scalar_lea.vmem %s0, %s200
        %p202 = pneg %p40
        %p203 = pneg %p37
        %p204 = pneg %p61
        %p205 = pneg %p58
        %p206 = pneg %p82
        %p207 = pneg %p79
        %p208 = pneg %p103
        %p209 = pneg %p100
        %p210 = pneg %p124
        %p211 = pneg %p121
        %p212 = pneg %p150
        %p213 = pneg %p147
        %s214 = sand.u32 %s137, 1
        %s215 = scalar_lea.sflag [#allocation3], %s214
        %s216 = sand.u32 %s137, 1
        %s217 = smul.addr %s216, 128
        %s218 = scalar_lea.vmem [#allocation2], %s217
        %s219 = smul.u32 16, %s19
        %p220 = scmp.lt.s32.totalorder %s219, 31
        %s221 = scalar_select %p220, %s219, 31
        %s222 = smul.addr %s221, 8
        %s223 = scalar_lea.vmem %s0, %s222
        %s224 = smul.u32 16, %s19
        %s225 = smul.u32 16, %s19
        %v227 = vld [vmem:[%s223] sm:$0xff]
        %v228 = vld [vmem:[%s223 + $0x8] sm:$0xff]
        %v229 = vld [vmem:[%s223 + $0x10] sm:$0xff]
        %v230 = vld [vmem:[%s223 + $0x18] sm:$0xff]
        %v231 = vld [vmem:[%s223 + $0x20] sm:$0xff]
        %v232 = vld [vmem:[%s223 + $0x28] sm:$0xff]
        %v233 = vld [vmem:[%s223 + $0x30] sm:$0xff]
        %v234 = vld [vmem:[%s223 + $0x38] sm:$0xff]
        %v235 = vld [vmem:[%s223 + $0x40] sm:$0xff]
        %v236 = vld [vmem:[%s223 + $0x48] sm:$0xff]
        %v237 = vld [vmem:[%s223 + $0x50] sm:$0xff]
        %v238 = vld [vmem:[%s223 + $0x58] sm:$0xff]
        %v239 = vld [vmem:[%s223 + $0x60] sm:$0xff]
        %v240 = vld [vmem:[%s223 + $0x68] sm:$0xff]
        %v241 = vld [vmem:[%s223 + $0x70] sm:$0xff]
        %v242 = vld [vmem:[%s223 + $0x78] sm:$0xff]
        %v243 = vpack.c.bf16 %v228, %v227
        %v244 = vpack.c.bf16 %v230, %v229
        %v245 = vpack.c.bf16 %v232, %v231
        %v246 = vpack.c.bf16 %v234, %v233
        %v247 = vpack.c.bf16 %v236, %v235
        %v248 = vpack.c.bf16 %v238, %v237
        %v249 = vpack.c.bf16 %v240, %v239
        %v250 = vpack.c.bf16 %v242, %v241
        %v251 = vld [vmem:[%s1] sm:$0xf]
        %v252 = vld [vmem:[%s1 + $0x4] sm:$0xf]
        %v253 = vld [vmem:[%s1 + $0x8] sm:$0xf]
        %v254 = vld [vmem:[%s1 + $0xc] sm:$0xf]
        %v255 = vld [vmem:[%s2] sm:$0x1]
        %v257 = vlaneseq
        %v258 = vshrl.u32 %v257, 7
        %v259 = vsub.s32 0, %v258
        %v260 = vrot.slane %v255, %v259
        %v266 = vunpack.c.l.b16 %v251
        %v267 = vunpack.c.l.b16 %v252
        %v268 = vunpack.c.l.b16 %v253
        %v269 = vunpack.c.l.b16 %v254
        %v270 = vpack.c.b16 %v267, %v266
        %v271 = vpack.c.b16 %v269, %v268
        %vm274 = vcmask 261120
        %v276 = vsel %vm274, %v243, 0
        %v279 = vsel %vm274, %v244, 0
        %v282 = vsel %vm274, %v245, 0
        %v285 = vsel %vm274, %v246, 0
        %v288 = vsel %vm274, %v247, 0
        %v291 = vsel %vm274, %v248, 0
        %v294 = vsel %vm274, %v249, 0
        %v297 = vsel %vm274, %v250, 0
        %299 = vmatprep.subr.bf16.mxu0 0
        %300 = vmatpush1.bf16.msra.mxu0 %v270
        %301 = vmatprep.subr.bf16.mxu0 0
        %302 = vmatpush1.bf16.msra.mxu0 %v271
        %303 = vmatprep.subr.bf16.mxu0 0
        %304 = vmatpush1.bf16.msra.mxu0 0
        %305 = vmatprep.subr.bf16.mxu0 0
        %306 = vmatpush1.bf16.msra.mxu0 0
        %307 = vmatprep.subr.bf16.mxu0 0
        %308 = vmatpush1.bf16.msra.mxu0 0
        %309 = vmatprep.subr.bf16.mxu0 0
        %310 = vmatpush1.bf16.msra.mxu0 0
        %311 = vmatprep.subr.bf16.mxu0 0
        %312 = vmatpush1.bf16.msra.mxu0 0
        %313 = vmatprep.subr.bf16.mxu0 0
        %314 = vmatpush1.bf16.msra.mxu0 0
        %315 = vmatprep.subr.bf16.mxu0 0
        %316 = vmatpush1.bf16.msra.mxu0 0
        %317 = vmatprep.subr.bf16.mxu0 0
        %318 = vmatpush1.bf16.msra.mxu0 0
        %319 = vmatprep.subr.bf16.mxu0 0
        %320 = vmatpush1.bf16.msra.mxu0 0
        %321 = vmatprep.subr.bf16.mxu0 0
        %322 = vmatpush1.bf16.msra.mxu0 0
        %323 = vmatprep.subr.bf16.mxu0 0
        %324 = vmatpush1.bf16.msra.mxu0 0
        %325 = vmatprep.subr.bf16.mxu0 0
        %326 = vmatpush1.bf16.msra.mxu0 0
        %327 = vmatprep.subr.bf16.mxu0 0
        %328 = vmatpush1.bf16.msra.mxu0 0
        %329 = vmatprep.subr.bf16.mxu0 0
        %330 = vmatpush1.bf16.msra.mxu0 0
        %331 = vmatprep.mubr.bf16.mxu0 0
        %332 = vmatmul.mubr.bf16.gmra.mrb[0].mxu0 %v276
        %v333 = vpop.f32.mrb[0].mxu0
        %v334 = vadd.f32 %v260, %v333
        %v335 = vpop.f32.mrb[0].mxu0
        %v336 = vpop.f32.mrb[0].mxu0
        %v337 = vadd.f32 %v260, %v336
        %v338 = vpop.f32.mrb[0].mxu0
        %339 = vmatprep.mubr.bf16.mxu0 0
        %340 = vmatmul.mubr.bf16.gmra.mrb[0].mxu0 %v279
        %v341 = vpop.f32.mrb[0].mxu0
        %v342 = vadd.f32 %v260, %v341
        %v343 = vpop.f32.mrb[0].mxu0
        %v344 = vpop.f32.mrb[0].mxu0
        %v345 = vadd.f32 %v260, %v344
        %v346 = vpop.f32.mrb[0].mxu0
        %347 = vmatprep.mubr.bf16.mxu0 0
        %348 = vmatmul.mubr.bf16.gmra.mrb[0].mxu0 %v282
        %v349 = vpop.f32.mrb[0].mxu0
        %v350 = vadd.f32 %v260, %v349
        %v351 = vpop.f32.mrb[0].mxu0
        %v352 = vpop.f32.mrb[0].mxu0
        %v353 = vadd.f32 %v260, %v352
        %v354 = vpop.f32.mrb[0].mxu0
        %355 = vmatprep.mubr.bf16.mxu0 0
        %356 = vmatmul.mubr.bf16.gmra.mrb[0].mxu0 %v285
        %v357 = vpop.f32.mrb[0].mxu0
        %v358 = vadd.f32 %v260, %v357
        %v359 = vpop.f32.mrb[0].mxu0
        %v360 = vpop.f32.mrb[0].mxu0
        %v361 = vadd.f32 %v260, %v360
        %v362 = vpop.f32.mrb[0].mxu0
        %363 = vmatprep.mubr.bf16.mxu0 0
        %364 = vmatmul.mubr.bf16.gmra.mrb[0].mxu0 %v288
        %v365 = vpop.f32.mrb[0].mxu0
        %v366 = vadd.f32 %v260, %v365
        %v367 = vpop.f32.mrb[0].mxu0
        %v368 = vpop.f32.mrb[0].mxu0
        %v369 = vadd.f32 %v260, %v368
        %v370 = vpop.f32.mrb[0].mxu0
        %371 = vmatprep.mubr.bf16.mxu0 0
        %372 = vmatmul.mubr.bf16.gmra.mrb[0].mxu0 %v291
        %v373 = vpop.f32.mrb[0].mxu0
        %v374 = vadd.f32 %v260, %v373
        %v375 = vpop.f32.mrb[0].mxu0
        %v376 = vpop.f32.mrb[0].mxu0
        %v377 = vadd.f32 %v260, %v376
        %v378 = vpop.f32.mrb[0].mxu0
        %379 = vmatprep.mubr.bf16.mxu0 0
        %380 = vmatmul.mubr.bf16.gmra.mrb[0].mxu0 %v294
        %v381 = vpop.f32.mrb[0].mxu0
        %v382 = vadd.f32 %v260, %v381
        %v383 = vpop.f32.mrb[0].mxu0
        %v384 = vpop.f32.mrb[0].mxu0
        %v385 = vadd.f32 %v260, %v384
        %v386 = vpop.f32.mrb[0].mxu0
        %387 = vmatprep.mubr.bf16.mxu0 0
        %388 = vmatmul.mubr.bf16.gmra.mrb[0].mxu0 %v297
        %v389 = vpop.f32.mrb[0].mxu0
        %v390 = vadd.f32 %v260, %v389
        %v391 = vpop.f32.mrb[0].mxu0
        %v392 = vpop.f32.mrb[0].mxu0
        %v393 = vadd.f32 %v260, %v392
        %v394 = vpop.f32.mrb[0].mxu0
        %395 = vdwg.mxu0
        %v396 = vmax.f32 %v334, 0.0
        %v397 = vmax.f32 %v337, 0.0
        %v398 = vmax.f32 %v342, 0.0
        %v399 = vmax.f32 %v345, 0.0
        %v400 = vmax.f32 %v350, 0.0
        %v401 = vmax.f32 %v353, 0.0
        %v402 = vmax.f32 %v358, 0.0
        %v403 = vmax.f32 %v361, 0.0
        %v404 = vmax.f32 %v366, 0.0
        %v405 = vmax.f32 %v369, 0.0
        %v406 = vmax.f32 %v374, 0.0
        %v407 = vmax.f32 %v377, 0.0
        %v408 = vmax.f32 %v382, 0.0
        %v409 = vmax.f32 %v385, 0.0
        %v410 = vmax.f32 %v390, 0.0
        %v411 = vmax.f32 %v393, 0.0
        %v412 = vpack.c.bf16 %v397, %v396
        %v413 = vpack.c.bf16 %v399, %v398
        %v414 = vpack.c.bf16 %v401, %v400
        %v415 = vpack.c.bf16 %v403, %v402
        %v416 = vpack.c.bf16 %v405, %v404
        %v417 = vpack.c.bf16 %v407, %v406
        %v418 = vpack.c.bf16 %v409, %v408
        %v419 = vpack.c.bf16 %v411, %v410
        %v420 = vld [vmem:[%s3] sm:$0xf]
        %v421 = vld [vmem:[%s3 + $0x4] sm:$0xf]
        %v422 = vld [vmem:[%s3 + $0x8] sm:$0xf]
        %v423 = vld [vmem:[%s3 + $0xc] sm:$0xf]
        %v424 = vld [vmem:[%s3 + $0x10] sm:$0xf]
        %v425 = vld [vmem:[%s3 + $0x14] sm:$0xf]
        %v426 = vld [vmem:[%s3 + $0x18] sm:$0xf]
        %v427 = vld [vmem:[%s3 + $0x1c] sm:$0xf]
        %v428 = vld [vmem:[%s3 + $0x20] sm:$0xf]
        %v429 = vld [vmem:[%s3 + $0x24] sm:$0xf]
        %v430 = vld [vmem:[%s3 + $0x28] sm:$0xf]
        %v431 = vld [vmem:[%s3 + $0x2c] sm:$0xf]
        %v432 = vld [vmem:[%s3 + $0x30] sm:$0xf]
        %v433 = vld [vmem:[%s3 + $0x34] sm:$0xf]
        %v434 = vld [vmem:[%s3 + $0x38] sm:$0xf]
        %v435 = vld [vmem:[%s3 + $0x3c] sm:$0xf]
        %v436 = vld [vmem:[%s4] sm:$0x1]
        %v438 = vlaneseq
        %v439 = vshrl.u32 %v438, 7
        %v440 = vsub.s32 0, %v439
        %v441 = vrot.slane %v436, %v440
        %v459 = vunpack.c.l.b16 %v420
        %v460 = vunpack.c.l.b16 %v421
        %v461 = vunpack.c.l.b16 %v422
        %v462 = vunpack.c.l.b16 %v423
        %v463 = vunpack.c.l.b16 %v424
        %v464 = vunpack.c.l.b16 %v425
        %v465 = vunpack.c.l.b16 %v426
        %v466 = vunpack.c.l.b16 %v427
        %v467 = vunpack.c.l.b16 %v428
        %v468 = vunpack.c.l.b16 %v429
        %v469 = vunpack.c.l.b16 %v430
        %v470 = vunpack.c.l.b16 %v431
        %v471 = vunpack.c.l.b16 %v432
        %v472 = vunpack.c.l.b16 %v433
        %v473 = vunpack.c.l.b16 %v434
        %v474 = vunpack.c.l.b16 %v435
        %v475 = vpack.c.b16 %v460, %v459
        %v476 = vpack.c.b16 %v462, %v461
        %v477 = vpack.c.b16 %v464, %v463
        %v478 = vpack.c.b16 %v466, %v465
        %v479 = vpack.c.b16 %v468, %v467
        %v480 = vpack.c.b16 %v470, %v469
        %v481 = vpack.c.b16 %v472, %v471
        %v482 = vpack.c.b16 %v474, %v473
        %491 = vmatprep.subr.bf16.mxu0 0
        %492 = vmatpush1.bf16.msra.mxu0 %v475
        %493 = vmatprep.subr.bf16.mxu0 0
        %494 = vmatpush1.bf16.msra.mxu0 %v476
        %495 = vmatprep.subr.bf16.mxu0 0
        %496 = vmatpush1.bf16.msra.mxu0 %v477
        %497 = vmatprep.subr.bf16.mxu0 0
        %498 = vmatpush1.bf16.msra.mxu0 %v478
        %499 = vmatprep.subr.bf16.mxu0 0
        %500 = vmatpush1.bf16.msra.mxu0 %v479
        %501 = vmatprep.subr.bf16.mxu0 0
        %502 = vmatpush1.bf16.msra.mxu0 %v480
        %503 = vmatprep.subr.bf16.mxu0 0
        %504 = vmatpush1.bf16.msra.mxu0 %v481
        %505 = vmatprep.subr.bf16.mxu0 0
        %506 = vmatpush1.bf16.msra.mxu0 %v482
        %507 = vmatprep.subr.bf16.mxu0 0
        %508 = vmatpush1.bf16.msra.mxu0 0
        %509 = vmatprep.subr.bf16.mxu0 0
        %510 = vmatpush1.bf16.msra.mxu0 0
        %511 = vmatprep.subr.bf16.mxu0 0
        %512 = vmatpush1.bf16.msra.mxu0 0
        %513 = vmatprep.subr.bf16.mxu0 0
        %514 = vmatpush1.bf16.msra.mxu0 0
        %515 = vmatprep.subr.bf16.mxu0 0
        %516 = vmatpush1.bf16.msra.mxu0 0
        %517 = vmatprep.subr.bf16.mxu0 0
        %518 = vmatpush1.bf16.msra.mxu0 0
        %519 = vmatprep.subr.bf16.mxu0 0
        %520 = vmatpush1.bf16.msra.mxu0 0
        %521 = vmatprep.subr.bf16.mxu0 0
        %522 = vmatpush1.bf16.msra.mxu0 0
        %523 = vmatprep.mubr.bf16.mxu0 0
        %524 = vmatmul.mubr.bf16.gmra.mrb[0].mxu0 %v412
        %v525 = vpop.f32.mrb[0].mxu0
        %v526 = vadd.f32 %v441, %v525
        %v527 = vpop.f32.mrb[0].mxu0
        %v528 = vpop.f32.mrb[0].mxu0
        %v529 = vadd.f32 %v441, %v528
        %v530 = vpop.f32.mrb[0].mxu0
        %531 = vmatprep.mubr.bf16.mxu0 0
        %532 = vmatmul.mubr.bf16.gmra.mrb[0].mxu0 %v413
        %v533 = vpop.f32.mrb[0].mxu0
        %v534 = vadd.f32 %v441, %v533
        %v535 = vpop.f32.mrb[0].mxu0
        %v536 = vpop.f32.mrb[0].mxu0
        %v537 = vadd.f32 %v441, %v536
        %v538 = vpop.f32.mrb[0].mxu0
        %539 = vmatprep.mubr.bf16.mxu0 0
        %540 = vmatmul.mubr.bf16.gmra.mrb[0].mxu0 %v414
        %v541 = vpop.f32.mrb[0].mxu0
        %v542 = vadd.f32 %v441, %v541
        %v543 = vpop.f32.mrb[0].mxu0
        %v544 = vpop.f32.mrb[0].mxu0
        %v545 = vadd.f32 %v441, %v544
        %v546 = vpop.f32.mrb[0].mxu0
        %547 = vmatprep.mubr.bf16.mxu0 0
        %548 = vmatmul.mubr.bf16.gmra.mrb[0].mxu0 %v415
        %v549 = vpop.f32.mrb[0].mxu0
        %v550 = vadd.f32 %v441, %v549
        %v551 = vpop.f32.mrb[0].mxu0
        %v552 = vpop.f32.mrb[0].mxu0
        %v553 = vadd.f32 %v441, %v552
        %v554 = vpop.f32.mrb[0].mxu0
        %555 = vmatprep.mubr.bf16.mxu0 0
        %556 = vmatmul.mubr.bf16.gmra.mrb[0].mxu0 %v416
        %v557 = vpop.f32.mrb[0].mxu0
        %v558 = vadd.f32 %v441, %v557
        %v559 = vpop.f32.mrb[0].mxu0
        %v560 = vpop.f32.mrb[0].mxu0
        %v561 = vadd.f32 %v441, %v560
        %v562 = vpop.f32.mrb[0].mxu0
        %563 = vmatprep.mubr.bf16.mxu0 0
        %564 = vmatmul.mubr.bf16.gmra.mrb[0].mxu0 %v417
        %v565 = vpop.f32.mrb[0].mxu0
        %v566 = vadd.f32 %v441, %v565
        %v567 = vpop.f32.mrb[0].mxu0
        %v568 = vpop.f32.mrb[0].mxu0
        %v569 = vadd.f32 %v441, %v568
        %v570 = vpop.f32.mrb[0].mxu0
        %571 = vmatprep.mubr.bf16.mxu0 0
        %572 = vmatmul.mubr.bf16.gmra.mrb[0].mxu0 %v418
        %v573 = vpop.f32.mrb[0].mxu0
        %v574 = vadd.f32 %v441, %v573
        %v575 = vpop.f32.mrb[0].mxu0
        %v576 = vpop.f32.mrb[0].mxu0
        %v577 = vadd.f32 %v441, %v576
        %v578 = vpop.f32.mrb[0].mxu0
        %579 = vmatprep.mubr.bf16.mxu0 0
        %580 = vmatmul.mubr.bf16.gmra.mrb[0].mxu0 %v419
        %v581 = vpop.f32.mrb[0].mxu0
        %v582 = vadd.f32 %v441, %v581
        %v583 = vpop.f32.mrb[0].mxu0
        %v584 = vpop.f32.mrb[0].mxu0
        %v585 = vadd.f32 %v441, %v584
        %v586 = vpop.f32.mrb[0].mxu0
        %587 = vdwg.mxu0
        %588 = vst [vmem:[%s218] sm:$0xff] %v526
        %589 = vst [vmem:[%s218 + $0x8] sm:$0xff] %v529
        %590 = vst [vmem:[%s218 + $0x10] sm:$0xff] %v534
        %591 = vst [vmem:[%s218 + $0x18] sm:$0xff] %v537
        %592 = vst [vmem:[%s218 + $0x20] sm:$0xff] %v542
        %593 = vst [vmem:[%s218 + $0x28] sm:$0xff] %v545
        %594 = vst [vmem:[%s218 + $0x30] sm:$0xff] %v550
        %595 = vst [vmem:[%s218 + $0x38] sm:$0xff] %v553
        %596 = vst [vmem:[%s218 + $0x40] sm:$0xff] %v558
        %597 = vst [vmem:[%s218 + $0x48] sm:$0xff] %v561
        %598 = vst [vmem:[%s218 + $0x50] sm:$0xff] %v566
        %599 = vst [vmem:[%s218 + $0x58] sm:$0xff] %v569
        %600 = vst [vmem:[%s218 + $0x60] sm:$0xff] %v574
        %601 = vst [vmem:[%s218 + $0x68] sm:$0xff] %v577
        %602 = vst [vmem:[%s218 + $0x70] sm:$0xff] %v582
        %603 = vst [vmem:[%s218 + $0x78] sm:$0xff] %v585
        %s604 = sand.u32 %s137, 1
        %s605 = scalar_lea.sflag [#allocation3], %s604
        %s606 = sand.u32 %s137, 1
        %s607 = smul.addr %s606, 128
        %s608 = scalar_lea.vmem [#allocation2], %s607
        // Predicated region
        $region41: #{tpu_custom_call.1} parent=39 // pred_check
          %p609 = pneg %p147
        $region42: #{tpu_custom_call.1} parent=39 // pred_check_branch
          %611 = sbr.rel (%p609) target = $region44
        $region43: #{tpu_custom_call.1} parent=39 // pred_region
          %s612 = smul.u32 16, %s19
          %s614 = ssub.s32 2048, 2048
          %615 = vsyncadd %s605, %s614
          %s616 = smul.addr %s612, 128
          %s617 = scalar_lea.hbm %s5, %s616
          %s618 = sshll.u32 %s608, 4
          %s619 = int_to_ptr.vmem [resolvable:$true] %s618
          %624 = dma.vmem_to_hbm [thread:$0]  %s619, 2048, %s617, %s605, 128, 128, 8
        $region44: #{tpu_custom_call.1} parent=39 // pred_fallthru
          _
      $region40: #{tpu_custom_call.1} parent=5 // pred_fallthru
        _
      %p625 = scmp.le.s32.totalorder 2, %s14
      // Predicated region
      $region45: #{tpu_custom_call.1} parent=5 // pred_check
        %p626 = pneg %p625
      $region46: #{tpu_custom_call.1} parent=5 // pred_check_branch
        %628 = sbr.rel (%p626) target = $region48
      $region47: #{tpu_custom_call.1} parent=5 // pred_region
        %s629 = ssub.s32 %s14, 2
        // Predicated region
        $region49: #{tpu_custom_call.1} parent=47 // pred_check
          %p630 = pneg %p153
        $region50: #{tpu_custom_call.1} parent=47 // pred_check_branch
          %632 = sbr.rel (%p630) target = $region52
        $region51: #{tpu_custom_call.1} parent=47 // pred_region
          %s633 = sand.u32 %s138, 1
          %s634 = scalar_lea.sflag [#allocation3], %s633
          %s635 = sand.u32 %s138, 1
          %s636 = smul.addr %s635, 128
          %s637 = scalar_lea.vmem [#allocation2], %s636
          %638 = dma.done %s634, 2048
        $region52: #{tpu_custom_call.1} parent=47 // pred_fallthru
          _
      $region48: #{tpu_custom_call.1} parent=5 // pred_fallthru
        _
    $region6: #{tpu_custom_call.1} parent=1 // loop_footer
      %s18 = sadd.s32 1, %s14
    $region7: #{tpu_custom_call.1} parent=1 // loop_footer_branch
      %13 = sbr.rel target = $region3
    $region8: #{tpu_custom_call.1} parent=1 // loop_exit
      _
    %639 = vsyncpa [#allocation3], 1
    %s640 = scalar_lea.sflag [#allocation3], 1
    %641 = vsyncpa %s640, 1

// kernel: tpu_custom_call.1
$region0: #{tpu_custom_call.1}
  #allocation0 [shape = 'u32[]', space=smem, size = 0x4, offset = 0x4, fixed_abs, tag = 'smem constant byte address 0x4 - core index']
  #allocation1 [shape = 'u32[144,128]{1,0:T(1,128)}', space=vmem, size = 0x12000, scoped, tag = 'internal scratch']
  %s0 = inlined_call_operand.vmem [shape: f32[256,32], index: 0, kind: input, shape index: {}]
  %s1 = inlined_call_operand.vmem [shape: bf16[32,128], index: 1, kind: input, shape index: {}]
  %s2 = inlined_call_operand.vmem [shape: f32[1,128], index: 2, kind: input, shape index: {}]
  %s3 = inlined_call_operand.vmem [shape: bf16[128,128], index: 3, kind: input, shape index: {}]
  %s4 = inlined_call_operand.vmem [shape: f32[1,128], index: 4, kind: input, shape index: {}]
  %s5 = inlined_call_operand.hbm [shape: f32[256,128], index: 5, kind: output, shape index: {}]
  %s6 = sld [smem:[#allocation0]]
  $region53: #{tpu_custom_call.1} parent=0
    _
  %s8 = ssub.s32 1, %s6
  %s9 = scalar_select 0, %s8, %s6
  $region1: #{tpu_custom_call.1} parent=0
    #allocation2 [shape = 'u8[131072]{0}', space=vmem, size = 0x20000, scoped, tag = 'output window, operand 0']
    #allocation3 [shape = 's32[2]{0}', space=sflag, size = 0x8, scoped, tag = 'scoped memory for tpu_custom_call.1']
    %10 = vsyncpa [#allocation3], 0
    %s11 = scalar_lea.sflag [#allocation3], 1
    %12 = vsyncpa %s11, 0
    loop: start=0, step=1, limit=4
    $region2: #{tpu_custom_call.1} parent=1 // loop_pre_header
      _
    $region3: #{tpu_custom_call.1} parent=1 // loop_header
      %s14 = sphi 0, %s18
      %p15 = scmp.ge.s32.totalorder %s14, 4
      %s24 = sphi 0, %s26
      %s27 = sphi 0, %s24
      %s28 = sphi 0, %s27
      %s44 = sphi 0, %s28
      %s48 = sphi 0, %s48
      %s50 = sphi 0, %s48
      %s51 = sphi 0, %s50
      %s65 = sphi 0, %s51
      %s69 = sphi 0, %s69
      %s71 = sphi 0, %s69
      %s72 = sphi 0, %s71
      %s86 = sphi 0, %s72
      %s90 = sphi 0, %s90
      %s92 = sphi 0, %s90
      %s93 = sphi 0, %s92
      %s107 = sphi 0, %s93
      %s111 = sphi 0, %s111
      %s113 = sphi 0, %s111
      %s114 = sphi 0, %s113
      %s128 = sphi 0, %s114
      %s134 = sphi 0, %s136
      %s137 = sphi 0, %s134
      %s138 = sphi 0, %s137
      %s154 = sphi 0, %s138
    $region4: #{tpu_custom_call.1} parent=1 // loop_header_branch
      %17 = sbr.rel (%p15) target = $region8
    $region5: #{tpu_custom_call.1} parent=1 // loop_body
      %s19 = ssub.s32 %s14, 1
      %s20 = ssub.s32 %s14, 2
      %s21 = sadd.s32 %s14, 1
      %s22 = ssub.s32 %s14, %s21
      %p23 = scmp.eq.s32.totalorder %s22, 0
      %s25 = sadd.s32 %s24, 1
      %s26 = scalar_select %p23, %s24, %s25
      %p29 = pneg %p23
      %p30 = scmp.eq.s32.totalorder %s14, 1
      %p31 = por %p29, %p30
      %p32 = scmp.ne.s32.totalorder %s24, %s27
      %p33 = scmp.eq.s32.totalorder %s14, 0
      %p34 = por %p32, %p33
      %p35 = scmp.ne.s32.totalorder %s24, %s27
      %p36 = scmp.eq.s32.totalorder %s19, 1
      %p37 = por %p35, %p36
      %p38 = scmp.ne.s32.totalorder %s27, %s28
      %p39 = scmp.eq.s32.totalorder %s19, 0
      %p40 = por %p38, %p39
      %p41 = scmp.ne.s32.totalorder %s27, %s28
      %p42 = scmp.eq.s32.totalorder %s20, 1
      %p43 = por %p41, %p42
      %p45 = scmp.ne.s32.totalorder %s28, %s44
      %p46 = scmp.eq.s32.totalorder %s20, 0
      %p47 = por %p45, %p46
      %s49 = sadd.s32 %s48, 1
      %p52 = scmp.eq.s32.totalorder %s14, 1
      %p53 = scmp.ne.s32.totalorder %s48, %s50
      %p54 = scmp.eq.s32.totalorder %s14, 0
      %p55 = por %p53, %p54
      %p56 = scmp.ne.s32.totalorder %s48, %s50
      %p57 = scmp.eq.s32.totalorder %s19, 1
      %p58 = por %p56, %p57
      %p59 = scmp.ne.s32.totalorder %s50, %s51
      %p60 = scmp.eq.s32.totalorder %s19, 0
      %p61 = por %p59, %p60
      %p62 = scmp.ne.s32.totalorder %s50, %s51
      %p63 = scmp.eq.s32.totalorder %s20, 1
      %p64 = por %p62, %p63
      %p66 = scmp.ne.s32.totalorder %s51, %s65
      %p67 = scmp.eq.s32.totalorder %s20, 0
      %p68 = por %p66, %p67
      %s70 = sadd.s32 %s69, 1
      %p73 = scmp.eq.s32.totalorder %s14, 1
      %p74 = scmp.ne.s32.totalorder %s69, %s71
      %p75 = scmp.eq.s32.totalorder %s14, 0
      %p76 = por %p74, %p75
      %p77 = scmp.ne.s32.totalorder %s69, %s71
      %p78 = scmp.eq.s32.totalorder %s19, 1
      %p79 = por %p77, %p78
      %p80 = scmp.ne.s32.totalorder %s71, %s72
      %p81 = scmp.eq.s32.totalorder %s19, 0
      %p82 = por %p80, %p81
      %p83 = scmp.ne.s32.totalorder %s71, %s72
      %p84 = scmp.eq.s32.totalorder %s20, 1
      %p85 = por %p83, %p84
      %p87 = scmp.ne.s32.totalorder %s72, %s86
      %p88 = scmp.eq.s32.totalorder %s20, 0
      %p89 = por %p87, %p88
      %s91 = sadd.s32 %s90, 1
      %p94 = scmp.eq.s32.totalorder %s14, 1
      %p95 = scmp.ne.s32.totalorder %s90, %s92
      %p96 = scmp.eq.s32.totalorder %s14, 0
      %p97 = por %p95, %p96
      %p98 = scmp.ne.s32.totalorder %s90, %s92
      %p99 = scmp.eq.s32.totalorder %s19, 1
      %p100 = por %p98, %p99
      %p101 = scmp.ne.s32.totalorder %s92, %s93
      %p102 = scmp.eq.s32.totalorder %s19, 0
      %p103 = por %p101, %p102
      %p104 = scmp.ne.s32.totalorder %s92, %s93
      %p105 = scmp.eq.s32.totalorder %s20, 1
      %p106 = por %p104, %p105
      %p108 = scmp.ne.s32.totalorder %s93, %s107
      %p109 = scmp.eq.s32.totalorder %s20, 0
      %p110 = por %p108, %p109
      %s112 = sadd.s32 %s111, 1
      %p115 = scmp.eq.s32.totalorder %s14, 1
      %p116 = scmp.ne.s32.totalorder %s111, %s113
      %p117 = scmp.eq.s32.totalorder %s14, 0
      %p118 = por %p116, %p117
      %p119 = scmp.ne.s32.totalorder %s111, %s113
      %p120 = scmp.eq.s32.totalorder %s19, 1
      %p121 = por %p119, %p120
      %p122 = scmp.ne.s32.totalorder %s113, %s114
      %p123 = scmp.eq.s32.totalorder %s19, 0
      %p124 = por %p122, %p123
      %p125 = scmp.ne.s32.totalorder %s113, %s114
      %p126 = scmp.eq.s32.totalorder %s20, 1
      %p127 = por %p125, %p126
      %p129 = scmp.ne.s32.totalorder %s114, %s128
      %p130 = scmp.eq.s32.totalorder %s20, 0
      %p131 = por %p129, %p130
      %s132 = ssub.s32 %s14, %s21
      %p133 = scmp.eq.s32.totalorder %s132, 0
      %s135 = sadd.s32 %s134, 1
      %s136 = scalar_select %p133, %s134, %s135
      %p139 = pneg %p133
      %p140 = scmp.eq.s32.totalorder %s14, 1
      %p141 = por %p139, %p140
      %p142 = scmp.ne.s32.totalorder %s134, %s137
      %p143 = scmp.eq.s32.totalorder %s14, 0
      %p144 = por %p142, %p143
      %p145 = scmp.ne.s32.totalorder %s134, %s137
      %p146 = scmp.eq.s32.totalorder %s19, 1
      %p147 = por %p145, %p146
      %p148 = scmp.ne.s32.totalorder %s137, %s138
      %p149 = scmp.eq.s32.totalorder %s19, 0
      %p150 = por %p148, %p149
      %p151 = scmp.ne.s32.totalorder %s137, %s138
      %p152 = scmp.eq.s32.totalorder %s20, 1
      %p153 = por %p151, %p152
      %p155 = scmp.ne.s32.totalorder %s138, %s154
      %p156 = scmp.eq.s32.totalorder %s20, 0
      %p157 = por %p155, %p156
      %p158 = scmp.le.s32.totalorder 1, %s14
      %p159 = scmp.lt.s32.totalorder %s14, 3
      %p160 = pnand %p158, %p159
      %p161 = pneg %p160
      // Predicated region
      $region9: #{tpu_custom_call.1} parent=5 // pred_check
        _
      $region10: #{tpu_custom_call.1} parent=5 // pred_check_branch
        %163 = sbr.rel (%p160) target = $region12
      $region11: #{tpu_custom_call.1} parent=5 // pred_region
        %s164 = ssub.s32 %s14, 1
        // Predicated region
        $region13: #{tpu_custom_call.1} parent=11 // pred_check
          %p165 = pneg %p61
        $region14: #{tpu_custom_call.1} parent=11 // pred_check_branch
          %167 = sbr.rel (%p165) target = $region16
        $region15: #{tpu_custom_call.1} parent=11 // pred_region
          _
        $region16: #{tpu_custom_call.1} parent=11 // pred_fallthru
          _
        // Predicated region
        $region17: #{tpu_custom_call.1} parent=11 // pred_check
          %p168 = pneg %p82
        $region18: #{tpu_custom_call.1} parent=11 // pred_check_branch
          %170 = sbr.rel (%p168) target = $region20
        $region19: #{tpu_custom_call.1} parent=11 // pred_region
          _
        $region20: #{tpu_custom_call.1} parent=11 // pred_fallthru
          _
        // Predicated region
        $region21: #{tpu_custom_call.1} parent=11 // pred_check
          %p171 = pneg %p103
        $region22: #{tpu_custom_call.1} parent=11 // pred_check_branch
          %173 = sbr.rel (%p171) target = $region24
        $region23: #{tpu_custom_call.1} parent=11 // pred_region
          _
        $region24: #{tpu_custom_call.1} parent=11 // pred_fallthru
          _
        // Predicated region
        $region25: #{tpu_custom_call.1} parent=11 // pred_check
          %p174 = pneg %p124
        $region26: #{tpu_custom_call.1} parent=11 // pred_check_branch
          %176 = sbr.rel (%p174) target = $region28
        $region27: #{tpu_custom_call.1} parent=11 // pred_region
          _
        $region28: #{tpu_custom_call.1} parent=11 // pred_fallthru
          _
      $region12: #{tpu_custom_call.1} parent=5 // pred_fallthru
        _
      %p177 = scmp.lt.s32.totalorder %s14, 2
      // Predicated region
      $region29: #{tpu_custom_call.1} parent=5 // pred_check
        %p178 = pneg %p177
      $region30: #{tpu_custom_call.1} parent=5 // pred_check_branch
        %180 = sbr.rel (%p178) target = $region32
      $region31: #{tpu_custom_call.1} parent=5 // pred_region
        // Predicated region
        $region33: #{tpu_custom_call.1} parent=31 // pred_check
          %p181 = pneg %p34
        $region34: #{tpu_custom_call.1} parent=31 // pred_check_branch
          %183 = sbr.rel (%p181) target = $region36
        $region35: #{tpu_custom_call.1} parent=31 // pred_region
          %s184 = smul.u32 16, %s14
          %p185 = scmp.lt.s32.totalorder %s184, 31
          %s186 = scalar_select %p185, %s184, 31
          %s187 = smul.addr %s186, 8
          %s188 = scalar_lea.vmem %s0, %s187
          %s189 = smul.u32 16, %s14
        $region36: #{tpu_custom_call.1} parent=31 // pred_fallthru
          _
      $region32: #{tpu_custom_call.1} parent=5 // pred_fallthru
        _
      %p190 = scmp.le.s32.totalorder 1, %s14
      %p191 = scmp.lt.s32.totalorder %s14, 3
      %p192 = pnand %p190, %p191
      %p193 = pneg %p192
      // Predicated region
      $region37: #{tpu_custom_call.1} parent=5 // pred_check
        _
      $region38: #{tpu_custom_call.1} parent=5 // pred_check_branch
        %195 = sbr.rel (%p192) target = $region40
      $region39: #{tpu_custom_call.1} parent=5 // pred_region
        %s196 = ssub.s32 %s14, 1
        %s197 = smul.u32 16, %s19
        %p198 = scmp.lt.s32.totalorder %s197, 31
        %s199 = scalar_select %p198, %s197, 31
        %s200 = smul.addr %s199, 8
        %s201 = scalar_lea.vmem %s0, %s200
        %p202 = pneg %p40
        %p203 = pneg %p37
        %p204 = pneg %p61
        %p205 = pneg %p58
        %p206 = pneg %p82
        %p207 = pneg %p79
        %p208 = pneg %p103
        %p209 = pneg %p100
        %p210 = pneg %p124
        %p211 = pneg %p121
        %p212 = pneg %p150
        %p213 = pneg %p147
        %s214 = sand.u32 %s137, 1
        %s215 = scalar_lea.sflag [#allocation3], %s214
        %s216 = sand.u32 %s137, 1
        %s217 = smul.addr %s216, 128
        %s218 = scalar_lea.vmem [#allocation2], %s217
        %s219 = smul.u32 16, %s19
        %p220 = scmp.lt.s32.totalorder %s219, 31
        %s221 = scalar_select %p220, %s219, 31
        %s222 = smul.addr %s221, 8
        %s223 = scalar_lea.vmem %s0, %s222
        %s224 = smul.u32 16, %s19
        %s225 = smul.u32 16, %s19
        %v227 = vld [vmem:[%s223] sm:$0xff]
        %v228 = vld [vmem:[%s223 + $0x8] sm:$0xff]
        %v229 = vld [vmem:[%s223 + $0x10] sm:$0xff]
        %v230 = vld [vmem:[%s223 + $0x18] sm:$0xff]
        %v231 = vld [vmem:[%s223 + $0x20] sm:$0xff]
        %v232 = vld [vmem:[%s223 + $0x28] sm:$0xff]
        %v233 = vld [vmem:[%s223 + $0x30] sm:$0xff]
        %v234 = vld [vmem:[%s223 + $0x38] sm:$0xff]
        %v235 = vld [vmem:[%s223 + $0x40] sm:$0xff]
        %v236 = vld [vmem:[%s223 + $0x48] sm:$0xff]
        %v237 = vld [vmem:[%s223 + $0x50] sm:$0xff]
        %v238 = vld [vmem:[%s223 + $0x58] sm:$0xff]
        %v239 = vld [vmem:[%s223 + $0x60] sm:$0xff]
        %v240 = vld [vmem:[%s223 + $0x68] sm:$0xff]
        %v241 = vld [vmem:[%s223 + $0x70] sm:$0xff]
        %v242 = vld [vmem:[%s223 + $0x78] sm:$0xff]
        %v243 = vpack.c.bf16 %v228, %v227
        %v244 = vpack.c.bf16 %v230, %v229
        %v245 = vpack.c.bf16 %v232, %v231
        %v246 = vpack.c.bf16 %v234, %v233
        %v247 = vpack.c.bf16 %v236, %v235
        %v248 = vpack.c.bf16 %v238, %v237
        %v249 = vpack.c.bf16 %v240, %v239
        %v250 = vpack.c.bf16 %v242, %v241
        %v251 = vld [vmem:[%s1] sm:$0xf]
        %v252 = vld [vmem:[%s1 + $0x4] sm:$0xf]
        %v253 = vld [vmem:[%s1 + $0x8] sm:$0xf]
        %v254 = vld [vmem:[%s1 + $0xc] sm:$0xf]
        %v255 = vld [vmem:[%s2] sm:$0x1]
        %v257 = vlaneseq
        %v258 = vshrl.u32 %v257, 7
        %v259 = vsub.s32 0, %v258
        %v260 = vrot.slane %v255, %v259
        %v266 = vunpack.c.l.b16 %v251
        %v267 = vunpack.c.l.b16 %v252
        %v268 = vunpack.c.l.b16 %v253
        %v269 = vunpack.c.l.b16 %v254
        %v270 = vpack.c.b16 %v267, %v266
        %v271 = vpack.c.b16 %v269, %v268
        %vm274 = vcmask 261120
        %v276 = vsel %vm274, %v243, 0
        %v279 = vsel %vm274, %v244, 0
        %v282 = vsel %vm274, %v245, 0
        %v285 = vsel %vm274, %v246, 0
        %v288 = vsel %vm274, %v247, 0
        %v291 = vsel %vm274, %v248, 0
        %v294 = vsel %vm274, %v249, 0
        %v297 = vsel %vm274, %v250, 0
        %299 = vmatprep.subr.bf16.mxu0 0
        %300 = vmatpush1.bf16.msra.mxu0 %v270
        %301 = vmatprep.subr.bf16.mxu0 0
        %302 = vmatpush1.bf16.msra.mxu0 %v271
        %303 = vmatprep.subr.bf16.mxu0 0
        %304 = vmatpush1.bf16.msra.mxu0 0
        %305 = vmatprep.subr.bf16.mxu0 0
        %306 = vmatpush1.bf16.msra.mxu0 0
        %307 = vmatprep.subr.bf16.mxu0 0
        %308 = vmatpush1.bf16.msra.mxu0 0
        %309 = vmatprep.subr.bf16.mxu0 0
        %310 = vmatpush1.bf16.msra.mxu0 0
        %311 = vmatprep.subr.bf16.mxu0 0
        %312 = vmatpush1.bf16.msra.mxu0 0
        %313 = vmatprep.subr.bf16.mxu0 0
        %314 = vmatpush1.bf16.msra.mxu0 0
        %315 = vmatprep.subr.bf16.mxu0 0
        %316 = vmatpush1.bf16.msra.mxu0 0
        %317 = vmatprep.subr.bf16.mxu0 0
        %318 = vmatpush1.bf16.msra.mxu0 0
        %319 = vmatprep.subr.bf16.mxu0 0
        %320 = vmatpush1.bf16.msra.mxu0 0
        %321 = vmatprep.subr.bf16.mxu0 0
        %322 = vmatpush1.bf16.msra.mxu0 0
        %323 = vmatprep.subr.bf16.mxu0 0
        %324 = vmatpush1.bf16.msra.mxu0 0
        %325 = vmatprep.subr.bf16.mxu0 0
        %326 = vmatpush1.bf16.msra.mxu0 0
        %327 = vmatprep.subr.bf16.mxu0 0
        %328 = vmatpush1.bf16.msra.mxu0 0
        %329 = vmatprep.subr.bf16.mxu0 0
        %330 = vmatpush1.bf16.msra.mxu0 0
        %331 = vmatprep.mubr.bf16.mxu0 0
        %332 = vmatmul.mubr.bf16.gmra.mrb[0].mxu0 %v276
        %v333 = vpop.f32.mrb[0].mxu0
        %v334 = vadd.f32 %v260, %v333
        %v335 = vpop.f32.mrb[0].mxu0
        %v336 = vpop.f32.mrb[0].mxu0
        %v337 = vadd.f32 %v260, %v336
        %v338 = vpop.f32.mrb[0].mxu0
        %339 = vmatprep.mubr.bf16.mxu0 0
        %340 = vmatmul.mubr.bf16.gmra.mrb[0].mxu0 %v279
        %v341 = vpop.f32.mrb[0].mxu0
        %v342 = vadd.f32 %v260, %v341
        %v343 = vpop.f32.mrb[0].mxu0
        %v344 = vpop.f32.mrb[0].mxu0
        %v345 = vadd.f32 %v260, %v344
        %v346 = vpop.f32.mrb[0].mxu0
        %347 = vmatprep.mubr.bf16.mxu0 0
        %348 = vmatmul.mubr.bf16.gmra.mrb[0].mxu0 %v282
        %v349 = vpop.f32.mrb[0].mxu0
        %v350 = vadd.f32 %v260, %v349
        %v351 = vpop.f32.mrb[0].mxu0
        %v352 = vpop.f32.mrb[0].mxu0
        %v353 = vadd.f32 %v260, %v352
        %v354 = vpop.f32.mrb[0].mxu0
        %355 = vmatprep.mubr.bf16.mxu0 0
        %356 = vmatmul.mubr.bf16.gmra.mrb[0].mxu0 %v285
        %v357 = vpop.f32.mrb[0].mxu0
        %v358 = vadd.f32 %v260, %v357
        %v359 = vpop.f32.mrb[0].mxu0
        %v360 = vpop.f32.mrb[0].mxu0
        %v361 = vadd.f32 %v260, %v360
        %v362 = vpop.f32.mrb[0].mxu0
        %363 = vmatprep.mubr.bf16.mxu0 0
        %364 = vmatmul.mubr.bf16.gmra.mrb[0].mxu0 %v288
        %v365 = vpop.f32.mrb[0].mxu0
        %v366 = vadd.f32 %v260, %v365
        %v367 = vpop.f32.mrb[0].mxu0
        %v368 = vpop.f32.mrb[0].mxu0
        %v369 = vadd.f32 %v260, %v368
        %v370 = vpop.f32.mrb[0].mxu0
        %371 = vmatprep.mubr.bf16.mxu0 0
        %372 = vmatmul.mubr.bf16.gmra.mrb[0].mxu0 %v291
        %v373 = vpop.f32.mrb[0].mxu0
        %v374 = vadd.f32 %v260, %v373
        %v375 = vpop.f32.mrb[0].mxu0
        %v376 = vpop.f32.mrb[0].mxu0
        %v377 = vadd.f32 %v260, %v376
        %v378 = vpop.f32.mrb[0].mxu0
        %379 = vmatprep.mubr.bf16.mxu0 0
        %380 = vmatmul.mubr.bf16.gmra.mrb[0].mxu0 %v294
        %v381 = vpop.f32.mrb[0].mxu0
        %v382 = vadd.f32 %v260, %v381
        %v383 = vpop.f32.mrb[0].mxu0
        %v384 = vpop.f32.mrb[0].mxu0
        %v385 = vadd.f32 %v260, %v384
        %v386 = vpop.f32.mrb[0].mxu0
        %387 = vmatprep.mubr.bf16.mxu0 0
        %388 = vmatmul.mubr.bf16.gmra.mrb[0].mxu0 %v297
        %v389 = vpop.f32.mrb[0].mxu0
        %v390 = vadd.f32 %v260, %v389
        %v391 = vpop.f32.mrb[0].mxu0
        %v392 = vpop.f32.mrb[0].mxu0
        %v393 = vadd.f32 %v260, %v392
        %v394 = vpop.f32.mrb[0].mxu0
        %395 = vdwg.mxu0
        %v396 = vmax.f32 %v334, 0.0
        %v397 = vmax.f32 %v337, 0.0
        %v398 = vmax.f32 %v342, 0.0
        %v399 = vmax.f32 %v345, 0.0
        %v400 = vmax.f32 %v350, 0.0
        %v401 = vmax.f32 %v353, 0.0
        %v402 = vmax.f32 %v358, 0.0
        %v403 = vmax.f32 %v361, 0.0
        %v404 = vmax.f32 %v366, 0.0
        %v405 = vmax.f32 %v369, 0.0
        %v406 = vmax.f32 %v374, 0.0
        %v407 = vmax.f32 %v377, 0.0
        %v408 = vmax.f32 %v382, 0.0
        %v409 = vmax.f32 %v385, 0.0
        %v410 = vmax.f32 %v390, 0.0
        %v411 = vmax.f32 %v393, 0.0
        %v412 = vpack.c.bf16 %v397, %v396
        %v413 = vpack.c.bf16 %v399, %v398
        %v414 = vpack.c.bf16 %v401, %v400
        %v415 = vpack.c.bf16 %v403, %v402
        %v416 = vpack.c.bf16 %v405, %v404
        %v417 = vpack.c.bf16 %v407, %v406
        %v418 = vpack.c.bf16 %v409, %v408
        %v419 = vpack.c.bf16 %v411, %v410
        %v420 = vld [vmem:[%s3] sm:$0xf]
        %v421 = vld [vmem:[%s3 + $0x4] sm:$0xf]
        %v422 = vld [vmem:[%s3 + $0x8] sm:$0xf]
        %v423 = vld [vmem:[%s3 + $0xc] sm:$0xf]
        %v424 = vld [vmem:[%s3 + $0x10] sm:$0xf]
        %v425 = vld [vmem:[%s3 + $0x14] sm:$0xf]
        %v426 = vld [vmem:[%s3 + $0x18] sm:$0xf]
        %v427 = vld [vmem:[%s3 + $0x1c] sm:$0xf]
        %v428 = vld [vmem:[%s3 + $0x20] sm:$0xf]
        %v429 = vld [vmem:[%s3 + $0x24] sm:$0xf]
        %v430 = vld [vmem:[%s3 + $0x28] sm:$0xf]
        %v431 = vld [vmem:[%s3 + $0x2c] sm:$0xf]
        %v432 = vld [vmem:[%s3 + $0x30] sm:$0xf]
        %v433 = vld [vmem:[%s3 + $0x34] sm:$0xf]
        %v434 = vld [vmem:[%s3 + $0x38] sm:$0xf]
        %v435 = vld [vmem:[%s3 + $0x3c] sm:$0xf]
        %v436 = vld [vmem:[%s4] sm:$0x1]
        %v438 = vlaneseq
        %v439 = vshrl.u32 %v438, 7
        %v440 = vsub.s32 0, %v439
        %v441 = vrot.slane %v436, %v440
        %v459 = vunpack.c.l.b16 %v420
        %v460 = vunpack.c.l.b16 %v421
        %v461 = vunpack.c.l.b16 %v422
        %v462 = vunpack.c.l.b16 %v423
        %v463 = vunpack.c.l.b16 %v424
        %v464 = vunpack.c.l.b16 %v425
        %v465 = vunpack.c.l.b16 %v426
        %v466 = vunpack.c.l.b16 %v427
        %v467 = vunpack.c.l.b16 %v428
        %v468 = vunpack.c.l.b16 %v429
        %v469 = vunpack.c.l.b16 %v430
        %v470 = vunpack.c.l.b16 %v431
        %v471 = vunpack.c.l.b16 %v432
        %v472 = vunpack.c.l.b16 %v433
        %v473 = vunpack.c.l.b16 %v434
        %v474 = vunpack.c.l.b16 %v435
        %v475 = vpack.c.b16 %v460, %v459
        %v476 = vpack.c.b16 %v462, %v461
        %v477 = vpack.c.b16 %v464, %v463
        %v478 = vpack.c.b16 %v466, %v465
        %v479 = vpack.c.b16 %v468, %v467
        %v480 = vpack.c.b16 %v470, %v469
        %v481 = vpack.c.b16 %v472, %v471
        %v482 = vpack.c.b16 %v474, %v473
        %491 = vmatprep.subr.bf16.mxu0 0
        %492 = vmatpush1.bf16.msra.mxu0 %v475
        %493 = vmatprep.subr.bf16.mxu0 0
        %494 = vmatpush1.bf16.msra.mxu0 %v476
        %495 = vmatprep.subr.bf16.mxu0 0
        %496 = vmatpush1.bf16.msra.mxu0 %v477
        %497 = vmatprep.subr.bf16.mxu0 0
        %498 = vmatpush1.bf16.msra.mxu0 %v478
        %499 = vmatprep.subr.bf16.mxu0 0
        %500 = vmatpush1.bf16.msra.mxu0 %v479
        %501 = vmatprep.subr.bf16.mxu0 0
        %502 = vmatpush1.bf16.msra.mxu0 %v480
        %503 = vmatprep.subr.bf16.mxu0 0
        %504 = vmatpush1.bf16.msra.mxu0 %v481
        %505 = vmatprep.subr.bf16.mxu0 0
        %506 = vmatpush1.bf16.msra.mxu0 %v482
        %507 = vmatprep.subr.bf16.mxu0 0
        %508 = vmatpush1.bf16.msra.mxu0 0
        %509 = vmatprep.subr.bf16.mxu0 0
        %510 = vmatpush1.bf16.msra.mxu0 0
        %511 = vmatprep.subr.bf16.mxu0 0
        %512 = vmatpush1.bf16.msra.mxu0 0
        %513 = vmatprep.subr.bf16.mxu0 0
        %514 = vmatpush1.bf16.msra.mxu0 0
        %515 = vmatprep.subr.bf16.mxu0 0
        %516 = vmatpush1.bf16.msra.mxu0 0
        %517 = vmatprep.subr.bf16.mxu0 0
        %518 = vmatpush1.bf16.msra.mxu0 0
        %519 = vmatprep.subr.bf16.mxu0 0
        %520 = vmatpush1.bf16.msra.mxu0 0
        %521 = vmatprep.subr.bf16.mxu0 0
        %522 = vmatpush1.bf16.msra.mxu0 0
        %523 = vmatprep.mubr.bf16.mxu0 0
        %524 = vmatmul.mubr.bf16.gmra.mrb[0].mxu0 %v412
        %v525 = vpop.f32.mrb[0].mxu0
        %v526 = vadd.f32 %v441, %v525
        %v527 = vpop.f32.mrb[0].mxu0
        %v528 = vpop.f32.mrb[0].mxu0
        %v529 = vadd.f32 %v441, %v528
        %v530 = vpop.f32.mrb[0].mxu0
        %531 = vmatprep.mubr.bf16.mxu0 0
        %532 = vmatmul.mubr.bf16.gmra.mrb[0].mxu0 %v413
        %v533 = vpop.f32.mrb[0].mxu0
        %v534 = vadd.f32 %v441, %v533
        %v535 = vpop.f32.mrb[0].mxu0
        %v536 = vpop.f32.mrb[0].mxu0
        %v537 = vadd.f32 %v441, %v536
        %v538 = vpop.f32.mrb[0].mxu0
        %539 = vmatprep.mubr.bf16.mxu0 0
        %540 = vmatmul.mubr.bf16.gmra.mrb[0].mxu0 %v414
        %v541 = vpop.f32.mrb[0].mxu0
        %v542 = vadd.f32 %v441, %v541
        %v543 = vpop.f32.mrb[0].mxu0
        %v544 = vpop.f32.mrb[0].mxu0
        %v545 = vadd.f32 %v441, %v544
        %v546 = vpop.f32.mrb[0].mxu0
        %547 = vmatprep.mubr.bf16.mxu0 0
        %548 = vmatmul.mubr.bf16.gmra.mrb[0].mxu0 %v415
        %v549 = vpop.f32.mrb[0].mxu0
        %v550 = vadd.f32 %v441, %v549
        %v551 = vpop.f32.mrb[0].mxu0
        %v552 = vpop.f32.mrb[0].mxu0
        %v553 = vadd.f32 %v441, %v552
        %v554 = vpop.f32.mrb[0].mxu0
        %555 = vmatprep.mubr.bf16.mxu0 0
        %556 = vmatmul.mubr.bf16.gmra.mrb[0].mxu0 %v416
        %v557 = vpop.f32.mrb[0].mxu0
        %v558 = vadd.f32 %v441, %v557
        %v559 = vpop.f32.mrb[0].mxu0
        %v560 = vpop.f32.mrb[0].mxu0
        %v561 = vadd.f32 %v441, %v560
        %v562 = vpop.f32.mrb[0].mxu0
        %563 = vmatprep.mubr.bf16.mxu0 0
        %564 = vmatmul.mubr.bf16.gmra.mrb[0].mxu0 %v417
        %v565 = vpop.f32.mrb[0].mxu0
        %v566 = vadd.f32 %v441, %v565
        %v567 = vpop.f32.mrb[0].mxu0
        %v568 = vpop.f32.mrb[0].mxu0
        %v569 = vadd.f32 %v441, %v568
        %v570 = vpop.f32.mrb[0].mxu0
        %571 = vmatprep.mubr.bf16.mxu0 0
        %572 = vmatmul.mubr.bf16.gmra.mrb[0].mxu0 %v418
        %v573 = vpop.f32.mrb[0].mxu0
        %v574 = vadd.f32 %v441, %v573
        %v575 = vpop.f32.mrb[0].mxu0
        %v576 = vpop.f32.mrb[0].mxu0
        %v577 = vadd.f32 %v441, %v576
        %v578 = vpop.f32.mrb[0].mxu0
        %579 = vmatprep.mubr.bf16.mxu0 0
        %580 = vmatmul.mubr.bf16.gmra.mrb[0].mxu0 %v419
        %v581 = vpop.f32.mrb[0].mxu0
        %v582 = vadd.f32 %v441, %v581
        %v583 = vpop.f32.mrb[0].mxu0
        %v584 = vpop.f32.mrb[0].mxu0
        %v585 = vadd.f32 %v441, %v584
        %v586 = vpop.f32.mrb[0].mxu0
        %587 = vdwg.mxu0
        %588 = vst [vmem:[%s218] sm:$0xff] %v526
        %589 = vst [vmem:[%s218 + $0x8] sm:$0xff] %v529
        %590 = vst [vmem:[%s218 + $0x10] sm:$0xff] %v534
        %591 = vst [vmem:[%s218 + $0x18] sm:$0xff] %v537
        %592 = vst [vmem:[%s218 + $0x20] sm:$0xff] %v542
        %593 = vst [vmem:[%s218 + $0x28] sm:$0xff] %v545
        %594 = vst [vmem:[%s218 + $0x30] sm:$0xff] %v550
        %595 = vst [vmem:[%s218 + $0x38] sm:$0xff] %v553
        %596 = vst [vmem:[%s218 + $0x40] sm:$0xff] %v558
        %597 = vst [vmem:[%s218 + $0x48] sm:$0xff] %v561
        %598 = vst [vmem:[%s218 + $0x50] sm:$0xff] %v566
        %599 = vst [vmem:[%s218 + $0x58] sm:$0xff] %v569
        %600 = vst [vmem:[%s218 + $0x60] sm:$0xff] %v574
        %601 = vst [vmem:[%s218 + $0x68] sm:$0xff] %v577
        %602 = vst [vmem:[%s218 + $0x70] sm:$0xff] %v582
        %603 = vst [vmem:[%s218 + $0x78] sm:$0xff] %v585
        %s604 = sand.u32 %s137, 1
        %s605 = scalar_lea.sflag [#allocation3], %s604
        %s606 = sand.u32 %s137, 1
        %s607 = smul.addr %s606, 128
        %s608 = scalar_lea.vmem [#allocation2], %s607
        // Predicated region
        $region41: #{tpu_custom_call.1} parent=39 // pred_check
          %p609 = pneg %p147
        $region42: #{tpu_custom_call.1} parent=39 // pred_check_branch
          %611 = sbr.rel (%p609) target = $region44
        $region43: #{tpu_custom_call.1} parent=39 // pred_region
          %s612 = smul.u32 16, %s19
          %s614 = ssub.s32 2048, 2048
          %615 = vsyncadd %s605, %s614
          %s616 = smul.addr %s612, 128
          %s617 = scalar_lea.hbm %s5, %s616
          %s618 = sshll.u32 %s608, 4
          %s619 = int_to_ptr.vmem [resolvable:$true] %s618
          %624 = dma.vmem_to_hbm [thread:$0]  %s619, 2048, %s617, %s605, 128, 128, 8
        $region44: #{tpu_custom_call.1} parent=39 // pred_fallthru
          _
      $region40: #{tpu_custom_call.1} parent=5 // pred_fallthru
        _
      %p625 = scmp.le.s32.totalorder 2, %s14
      // Predicated region
      $region45: #{tpu_custom_call.1} parent=5 // pred_check
        %p626 = pneg %p625
      $region46: #{tpu_custom_call.1} parent=5 // pred_check_branch
        %628 = sbr.rel (%p626) target = $region48
      $region47: #{tpu_custom_call.1} parent=5 // pred_region
        %s629 = ssub.s32 %s14, 2
        // Predicated region
        $region49: #{tpu_custom_call.1} parent=47 // pred_check
          %p630 = pneg %p153
        $region50: #{tpu_custom_call.1} parent=47 // pred_check_branch
          %632 = sbr.rel (%p630) target = $region52
        $region51: #{tpu_custom_call.1} parent=47 // pred_region
          %s633 = sand.u32 %s138, 1
          %s634 = scalar_lea.sflag [#allocation3], %s633
          %s635 = sand.u32 %s138, 1
          %s636 = smul.addr %s635, 128
          %s637 = scalar_lea.vmem [#allocation2], %s636
          %638 = dma.done %s634, 2048
        $region52: #{tpu_custom_call.1} parent=47 // pred_fallthru
          _
      $region48: #{tpu_custom_call.1} parent=5 // pred_fallthru
        _
    $region6: #{tpu_custom_call.1} parent=1 // loop_footer
      %s18 = sadd.s32 1, %s14
    $region7: #{tpu_custom_call.1} parent=1 // loop_footer_branch
      %13 = sbr.rel target = $region3
    $region8: #{tpu_custom_call.1} parent=1 // loop_exit
      _
    %639 = vsyncpa [#allocation3], 1
    %s640 = scalar_lea.sflag [#allocation3], 1
    %641 = vsyncpa %s640, 1

</llo_original>
